<compile_context>
chip_gen: v5e
topology: v5e:2x2
jax: 0.10.0
libtpu: 0.0.40
codegen_flags: <defaults>
</compile_context>

<pallas_src>
import functools

import jax
import jax.numpy as jnp
from jax import lax
from jax.experimental import pallas as pl
from jax.experimental.pallas import tpu as pltpu


# ---------------------------------------------------------------------------
# Kernel: per-row L2 normalize + bias add + (x + b) @ W^T on the MXU.
# ---------------------------------------------------------------------------
def _bais_layer_kernel(x_ref, bias_ref, wt_ref, o_ref, *, matmul_dtype):
    # x_ref: (TB, D)   bias_ref: (1, D) f32   wt_ref: (D, D) = (in, out)   o_ref: (TB, D)
    x = x_ref[...].astype(jnp.float32)

    # F.normalize(x, dim=-1): x / max(||x||, 1e-12) == x * rsqrt(max(sq, 1e-24)).
    sq = jnp.sum(x * x, axis=-1, keepdims=True)
    xn = x * lax.rsqrt(jnp.maximum(sq, 1e-24))

    # Bias already constrained (tanh(b/2)) in the wrapper; broadcast over rows.
    xb = xn + bias_ref[...]

    # nn.Linear: y = x @ W.T.  W was constrained + pre-transposed to (in, out)
    # and already stored in matmul_dtype, so this is a plain MXU contraction.
    y = jnp.dot(xb.astype(matmul_dtype), wt_ref[...],
                preferred_element_type=jnp.float32)

    o_ref[...] = y.astype(o_ref.dtype)


def bais_layer(x, bias, w, *, block_b=1024, matmul_dtype=jnp.bfloat16):
    """x: (B, D), bias: (1, D), w: (D, D) PyTorch (out_features, in_features)."""
    B, D = x.shape

    # value_constrain(..., 'sigmoid'): 2*sigmoid(v)-1 == tanh(v/2).  Done once
    # per forward in plain JAX (no extra pallas_call launch / HBM round trip).
    bias_c = jnp.tanh(0.5 * bias.astype(jnp.float32)).reshape(1, D)
    # Constrain + pre-transpose W to (in, out) layout, emitted directly in the
    # MXU operand dtype (halves the VMEM-resident weight when bf16).
    w_t = jnp.tanh(0.5 * w.astype(jnp.float32)).T.astype(matmul_dtype)

    # Batch tile: big tiles amortize per-grid-step overhead; when B is small,
    # split into >= 2 tiles (8-sublane granule) so v7x's two TCs both get work.
    if B > block_b:
        tb = block_b
    else:
        tb = min(B, max(8, ((pl.cdiv(B, 2) + 7) // 8) * 8))
    grid = (pl.cdiv(B, tb),)

    x_itemsize = jnp.dtype(x.dtype).itemsize
    w_bytes = D * D * jnp.dtype(matmul_dtype).itemsize
    # Footprint: double-buffered x + out tiles, (worst-case double-buffered)
    # resident W, bias, plus f32 temporaries inside the body.
    footprint = (2 * tb * D * x_itemsize      # x tiles (double-buffered)
                 + 2 * tb * D * x_itemsize    # out tiles (double-buffered)
                 + 2 * w_bytes                # W^T (assume double-buffered)
                 + 2 * D * 4                  # bias
                 + 4 * tb * D * 4)            # in-kernel f32 temporaries
    vmem_limit = int(min(max(2 * footprint, 16 << 20), 48 << 20))

    kernel = functools.partial(_bais_layer_kernel, matmul_dtype=matmul_dtype)

    return pl.pallas_call(
        kernel,
        out_shape=jax.ShapeDtypeStruct((B, D), x.dtype),
        grid_spec=pltpu.PrefetchScalarGridSpec(
            num_scalar_prefetch=0,
            grid=grid,
            in_specs=[
                pl.BlockSpec((tb, D), lambda i: (i, 0)),   # x: streams per tile
                pl.BlockSpec((1, D), lambda i: (0, 0)),    # bias: resident
                pl.BlockSpec((D, D), lambda i: (0, 0)),    # W^T: resident
            ],
            out_specs=pl.BlockSpec((tb, D), lambda i: (i, 0)),
        ),
        compiler_params=pltpu.CompilerParams(
            # Batch tiles are independent -> shard across TCs on v7x.
            dimension_semantics=("parallel",),
            vmem_limit_bytes=vmem_limit,
        ),
        cost_estimate=pl.CostEstimate(
            flops=2 * B * D * D + 3 * B * D,
            transcendentals=B,                               # one rsqrt per row
            bytes_accessed=2 * B * D * x_itemsize + w_bytes + D * 4,
        ),
    )(x, bias_c, w_t)


# ---------------------------------------------------------------------------
# Pure-JAX reference (matches the PyTorch forward exactly, f32 throughout).
# ---------------------------------------------------------------------------
def reference(x, bias, w):
    x = x.astype(jnp.float32)
    xn = x / jnp.maximum(jnp.linalg.norm(x, axis=-1, keepdims=True), 1e-12)
    bc = 2.0 * jax.nn.sigmoid(bias.astype(jnp.float32)) - 1.0
    wc = 2.0 * jax.nn.sigmoid(w.astype(jnp.float32)) - 1.0
    return (xn + bc) @ wc.T


if __name__ == "__main__":
    key = jax.random.PRNGKey(0)
    B, D = 8, 128  # output_dim = 128

    kx, kb, kw = jax.random.split(key, 3)
    x = jax.random.normal(kx, (B, D), dtype=jnp.float32)
    # nn.Parameter(torch.zeros(1, output_dim)) would be zeros; use small random
    # values so the constrain path is exercised nontrivially.
    bias = 0.1 * jax.random.normal(kb, (1, D), dtype=jnp.float32)
    w = jax.random.normal(kw, (D, D), dtype=jnp.float32) * (1.0 / jnp.sqrt(D))

    ref = reference(x, bias, w)

    # f32 MXU path: tight numerical check.
    out_f32 = bais_layer(x, bias, w, matmul_dtype=jnp.float32)
    jax.block_until_ready(out_f32)
    assert jnp.allclose(out_f32, ref, atol=1e-4, rtol=1e-4), (
        f"f32 max err {jnp.max(jnp.abs(out_f32 - ref))}"
    )

    # Default bf16 MXU path: operands bounded in [-1, 1] (tanh / normalize),
    # f32 accumulation -> loose tolerance suffices.
    out = bais_layer(x, bias, w)
    jax.block_until_ready(out)
    assert jnp.allclose(out, ref, atol=1e-2, rtol=1e-2), (
        f"bf16 max err {jnp.max(jnp.abs(out - ref))}"
    )

    print("KERNEL_OK")
</pallas_src>

<mosaic_0001>
module attributes {stable_mosaic.version = 11 : i64} {
  func.func @_bais_layer_kernel(%arg0: i32, %arg1: memref<8x128xf32, #tpu.memory_space<vmem>>, %arg2: memref<1x128xf32, #tpu.memory_space<vmem>>, %arg3: memref<128x128xf32, #tpu.memory_space<vmem>>, %arg4: memref<8x128xf32, #tpu.memory_space<vmem>>) attributes {dimension_semantics = [#tpu.dimension_semantics<parallel>], iteration_bounds = array<i64: 1>, scalar_prefetch = 0 : i64, scratch_operands = 0 : i64, tpu.core_type = #tpu.core_type<tc>, window_params = [{transform_indices = @transform_0, window_bounds = array<i64: 8, 128>}, {pipeline_mode = #tpu.pipeline_mode<synchronous>, transform_indices = @transform_1, window_bounds = array<i64: 1, 128>}, {pipeline_mode = #tpu.pipeline_mode<synchronous>, transform_indices = @transform_2, window_bounds = array<i64: 128, 128>}, {transform_indices = @transform_3, window_bounds = array<i64: 8, 128>}]} {
    %c0 = arith.constant 0 : index
    %c0_0 = arith.constant 0 : index
    %0 = vector.load %arg1[%c0, %c0_0] : memref<8x128xf32, #tpu.memory_space<vmem>>, vector<8x128xf32>
    %1 = arith.mulf %0, %0 : vector<8x128xf32>
    %cst = arith.constant dense<0.000000e+00> : vector<8xf32>
    %2 = vector.multi_reduction <add>, %1, %cst [1] : vector<8x128xf32> to vector<8xf32>
    %3 = vector.shape_cast %2 : vector<8xf32> to vector<8x1xf32>
    %cst_1 = arith.constant 1.000000e-24 : f32
    %4 = vector.broadcast %cst_1 : f32 to vector<8x1xf32>
    %5 = arith.maximumf %3, %4 : vector<8x1xf32>
    %6 = math.rsqrt %5 : vector<8x1xf32>
    %7 = vector.broadcast %6 : vector<8x1xf32> to vector<8x128xf32>
    %8 = arith.mulf %0, %7 : vector<8x128xf32>
    %c0_2 = arith.constant 0 : index
    %c0_3 = arith.constant 0 : index
    %9 = vector.load %arg2[%c0_2, %c0_3] : memref<1x128xf32, #tpu.memory_space<vmem>>, vector<1x128xf32>
    %10 = vector.broadcast %9 : vector<1x128xf32> to vector<8x128xf32>
    %11 = arith.addf %8, %10 : vector<8x128xf32>
    %c0_4 = arith.constant 0 : index
    %c0_5 = arith.constant 0 : index
    %12 = vector.load %arg3[%c0_4, %c0_5] : memref<128x128xf32, #tpu.memory_space<vmem>>, vector<128x128xf32>
    %cst_6 = arith.constant dense<0.000000e+00> : vector<8x128xf32>
    %13 = tpu.matmul %11, %12, %cst_6 {dimension_numbers = #tpu.dot_dimension_numbers<[1], [0], [0], [1], [0, 0, 1, 1], [], []>} : vector<8x128xf32>, vector<128x128xf32>, vector<8x128xf32> -> vector<8x128xf32>
    %c0_7 = arith.constant 0 : index
    %c0_8 = arith.constant 0 : index
    %14 = vector.load %arg4[%c0_7, %c0_8] : memref<8x128xf32, #tpu.memory_space<vmem>>, vector<8x128xf32>
    tpu.vector_store %arg4[%c0_7, %c0_8], %13 {strides = array<i32>} : memref<8x128xf32, #tpu.memory_space<vmem>>, vector<8x128xf32>,
    return
  }
  func.func @transform_0(%arg0: i32) -> (i32, i32) {
    %c0_i32 = arith.constant 0 : i32
    %c0_i32_0 = arith.constant 0 : i32
    return %arg0, %c0_i32 : i32, i32
  }
  func.func @transform_1(%arg0: i32) -> (i32, i32) {
    %c0_i32 = arith.constant 0 : i32
    %c0_i32_0 = arith.constant 0 : i32
    %c0_i32_1 = arith.constant 0 : i32
    return %c0_i32, %c0_i32_0 : i32, i32
  }
  func.func @transform_2(%arg0: i32) -> (i32, i32) {
    %c0_i32 = arith.constant 0 : i32
    %c0_i32_0 = arith.constant 0 : i32
    %c0_i32_1 = arith.constant 0 : i32
    return %c0_i32, %c0_i32_0 : i32, i32
  }
  func.func @transform_3(%arg0: i32) -> (i32, i32) {
    %c0_i32 = arith.constant 0 : i32
    %c0_i32_0 = arith.constant 0 : i32
    return %arg0, %c0_i32 : i32, i32
  }
}

</mosaic_0001>

<llo_original>
// kernel: tpu_custom_call.1
$region0: #{tpu_custom_call.1}
  #allocation0 [shape = 'u32[]', space=smem, size = 0x4, offset = 0x4, fixed_abs, tag = 'smem constant byte address 0x4 - core index']
  #allocation1 [shape = 'u32[72,128]{1,0:T(1,128)}', space=vmem, size = 0x9000, scoped, tag = 'internal scratch']
  %s0 = inlined_call_operand.hbm [shape: f32[8,128], index: 0, kind: input, shape index: {}]
  %s1 = inlined_call_operand.hbm [shape: f32[1,128], index: 1, kind: input, shape index: {}]
  %s2 = inlined_call_operand.hbm [shape: f32[128,128], index: 2, kind: input, shape index: {}]
  %s3 = inlined_call_operand.hbm [shape: f32[8,128], index: 3, kind: output, shape index: {}]
  %s4 = sld [smem:[#allocation0]]
  $region34: #{tpu_custom_call.1} parent=0
    _
  %s6 = ssub.s32 1, %s4
  %s7 = scalar_select 0, %s6, %s4
  $region1: #{tpu_custom_call.1} parent=0
    #allocation2 [shape = 'u8[4096]{0}', space=vmem, size = 0x1000, scoped, tag = 'input window, operand 0, single buffered']
    #allocation3 [shape = 's32[1]{0}', space=sflag, size = 0x4, scoped, tag = 'scoped memory for tpu_custom_call.1']
    #allocation4 [shape = 's32[1]{0}', space=sflag, size = 0x4, scoped, tag = 'scoped memory for tpu_custom_call.1']
    #allocation5 [shape = 'u8[512]{0}', space=vmem, size = 0x400, scoped, tag = 'input window, operand 1, single buffered']
    #allocation6 [shape = 's32[1]{0}', space=sflag, size = 0x4, scoped, tag = 'scoped memory for tpu_custom_call.1']
    #allocation7 [shape = 'u8[65536]{0}', space=vmem, size = 0x10000, scoped, tag = 'input window, operand 2, single buffered']
    #allocation8 [shape = 'u8[4096]{0}', space=vmem, size = 0x1000, scoped, tag = 'output window, operand 0, single buffered']
    %8 = vsyncpa [#allocation3], 0
    %9 = vsyncpa [#allocation6], 0
    %10 = vsyncpa [#allocation4], 0
    // Predicated region
    $region2: #{tpu_custom_call.1} parent=1 // pred_check
      _
    $region3: #{tpu_custom_call.1} parent=1 // pred_check_branch
      %12 = sbr.rel (0) target = $region5
    $region4: #{tpu_custom_call.1} parent=1 // pred_region
      %14 = vsyncadd [#allocation3], 0
      %s16 = sshll.u32 %s0, 4
      %s17 = int_to_ptr.hbm [resolvable:$true] %s16
      %s18 = sshll.u32 [#allocation2], 4
      %s19 = int_to_ptr.vmem [resolvable:$true] %s18
      %21 = dma.hbm_to_vmem [thread:$0]  %s17, 128, %s19, [#allocation3]
    $region5: #{tpu_custom_call.1} parent=1 // pred_fallthru
      _
    // Predicated region
    $region6: #{tpu_custom_call.1} parent=1 // pred_check
      _
    $region7: #{tpu_custom_call.1} parent=1 // pred_check_branch
      %23 = sbr.rel (0) target = $region9
    $region8: #{tpu_custom_call.1} parent=1 // pred_region
      %25 = vsyncadd [#allocation6], 0
      %s27 = sshll.u32 %s1, 4
      %s28 = int_to_ptr.hbm [resolvable:$true] %s27
      %s29 = sshll.u32 [#allocation5], 4
      %s30 = int_to_ptr.vmem [resolvable:$true] %s29
      %32 = dma.hbm_to_vmem [thread:$0]  %s28, 16, %s30, [#allocation6]
    $region9: #{tpu_custom_call.1} parent=1 // pred_fallthru
      _
    // Predicated region
    $region10: #{tpu_custom_call.1} parent=1 // pred_check
      _
    $region11: #{tpu_custom_call.1} parent=1 // pred_check_branch
      %34 = sbr.rel (0) target = $region13
    $region12: #{tpu_custom_call.1} parent=1 // pred_region
      %36 = vsyncadd [#allocation6], 0
      %s37 = sshll.u32 %s2, 4
      %s38 = int_to_ptr.hbm [resolvable:$true] %s37
      %s39 = sshll.u32 [#allocation7], 4
      %s40 = int_to_ptr.vmem [resolvable:$true] %s39
      %45 = dma.hbm_to_vmem [thread:$0]  %s38, 2048, %s40, [#allocation6], 128, 128, 8
    $region13: #{tpu_custom_call.1} parent=1 // pred_fallthru
      _
    // Predicated region
    $region14: #{tpu_custom_call.1} parent=1 // pred_check
      _
    $region15: #{tpu_custom_call.1} parent=1 // pred_check_branch
      %47 = sbr.rel (0) target = $region17
    $region16: #{tpu_custom_call.1} parent=1 // pred_region
      %49 = dma.done [#allocation3], 128
    $region17: #{tpu_custom_call.1} parent=1 // pred_fallthru
      _
    // Predicated region
    $region18: #{tpu_custom_call.1} parent=1 // pred_check
      _
    $region19: #{tpu_custom_call.1} parent=1 // pred_check_branch
      %51 = sbr.rel (0) target = $region21
    $region20: #{tpu_custom_call.1} parent=1 // pred_region
      %53 = dma.done [#allocation6], 16
    $region21: #{tpu_custom_call.1} parent=1 // pred_fallthru
      _
    // Predicated region
    $region22: #{tpu_custom_call.1} parent=1 // pred_check
      _
    $region23: #{tpu_custom_call.1} parent=1 // pred_check_branch
      %55 = sbr.rel (0) target = $region25
    $region24: #{tpu_custom_call.1} parent=1 // pred_region
      %57 = dma.done [#allocation6], 2048
    $region25: #{tpu_custom_call.1} parent=1 // pred_fallthru
      _
    %v58 = vld [vmem:[#allocation2] sm:$0xff]
    %v59 = vmul.f32 %v58, %v58
    %60 = vadd.xlane.f32.xlu0 %v59
    %v61 = vpop.xlane.xlu0 %60
    %v62 = vmax.f32 %v61, 1e-24
    %v63 = vrsqrt.pop %v62
    %v64 = vmul.f32 %v63, %v62
    %v65 = vmul.f32 %v64, %v63
    %v66 = vmul.f32 0.5, %v65
    %v67 = vsub.f32 1.5, %v66
    %v68 = vmul.f32 %v63, %v67
    %vm69 = vweird.f32 %v62
    %vm70 = vweird.f32 %v63
    %vm71 = vmor %vm69, %vm70
    %v72 = vsel %vm71, %v63, %v68
    %v73 = vmul.f32 %v58, %v72
    %v74 = vld [vmem:[#allocation5] sm:$0x1]
    %v76 = vperm.slane %v74, 0
    %v78 = vadd.f32 %v73, %v76
    %v79 = vld [vmem:[#allocation7] sm:$0xff]
    %v80 = vld [vmem:[#allocation7 + $0x8] sm:$0xff]
    %v81 = vld [vmem:[#allocation7 + $0x10] sm:$0xff]
    %v82 = vld [vmem:[#allocation7 + $0x18] sm:$0xff]
    %v83 = vld [vmem:[#allocation7 + $0x20] sm:$0xff]
    %v84 = vld [vmem:[#allocation7 + $0x28] sm:$0xff]
    %v85 = vld [vmem:[#allocation7 + $0x30] sm:$0xff]
    %v86 = vld [vmem:[#allocation7 + $0x38] sm:$0xff]
    %v87 = vld [vmem:[#allocation7 + $0x40] sm:$0xff]
    %v88 = vld [vmem:[#allocation7 + $0x48] sm:$0xff]
    %v89 = vld [vmem:[#allocation7 + $0x50] sm:$0xff]
    %v90 = vld [vmem:[#allocation7 + $0x58] sm:$0xff]
    %v91 = vld [vmem:[#allocation7 + $0x60] sm:$0xff]
    %v92 = vld [vmem:[#allocation7 + $0x68] sm:$0xff]
    %v93 = vld [vmem:[#allocation7 + $0x70] sm:$0xff]
    %v94 = vld [vmem:[#allocation7 + $0x78] sm:$0xff]
    %95 = vmatpush.msra.mxu0 %v94
    %96 = vmatpush.msra.mxu0 %v93
    %97 = vmatpush.msra.mxu0 %v92
    %98 = vmatpush.msra.mxu0 %v91
    %99 = vmatpush.msra.mxu0 %v90
    %100 = vmatpush.msra.mxu0 %v89
    %101 = vmatpush.msra.mxu0 %v88
    %102 = vmatpush.msra.mxu0 %v87
    %103 = vmatpush.msra.mxu0 %v86
    %104 = vmatpush.msra.mxu0 %v85
    %105 = vmatpush.msra.mxu0 %v84
    %106 = vmatpush.msra.mxu0 %v83
    %107 = vmatpush.msra.mxu0 %v82
    %108 = vmatpush.msra.mxu0 %v81
    %109 = vmatpush.msra.mxu0 %v80
    %110 = vmatpush.msra.mxu0 %v79
    %111 = vmatmul.f32.gmra.mxu0 %v78
    %v112 = vpop.f32.mrf.mxu0
    %v113 = vadd.f32 0.0, %v112
    %114 = vdwg.mxu0
    %115 = vst [vmem:[#allocation8] sm:$0xff] %v113
    // Predicated region
    $region26: #{tpu_custom_call.1} parent=1 // pred_check
      _
    $region27: #{tpu_custom_call.1} parent=1 // pred_check_branch
      %117 = sbr.rel (0) target = $region29
    $region28: #{tpu_custom_call.1} parent=1 // pred_region
      %119 = vsyncadd [#allocation4], 0
      %s121 = sshll.u32 [#allocation8], 4
      %s122 = int_to_ptr.vmem [resolvable:$true] %s121
      %s123 = sshll.u32 %s3, 4
      %s124 = int_to_ptr.hbm [resolvable:$true] %s123
      %126 = dma.vmem_to_hbm [thread:$0]  %s122, 128, %s124, [#allocation4]
    $region29: #{tpu_custom_call.1} parent=1 // pred_fallthru
      _
    // Predicated region
    $region30: #{tpu_custom_call.1} parent=1 // pred_check
      _
    $region31: #{tpu_custom_call.1} parent=1 // pred_check_branch
      %128 = sbr.rel (0) target = $region33
    $region32: #{tpu_custom_call.1} parent=1 // pred_region
      %130 = dma.done [#allocation4], 128
    $region33: #{tpu_custom_call.1} parent=1 // pred_fallthru
      _
    %131 = vsyncpa [#allocation3], 1
    %132 = vsyncpa [#allocation6], 1
    %133 = vsyncpa [#allocation4], 1

</llo_original>
